<compile_context>
chip_gen: v5e
topology: v5e:2x2
jax: 0.10.0
libtpu: 0.0.40
codegen_flags: <defaults>
</compile_context>

<pallas_src>
import jax
import jax.numpy as jnp
from jax.experimental import pallas as pl
from jax.experimental.pallas import tpu as pltpu


# ---------------------------------------------------------------------------
# Kernels
# ---------------------------------------------------------------------------
def _rowtile_matmul_kernel(x_ref, w_ref, o_ref):
    # out[row_tile] = x[row_tile] @ W ; single MXU matmul, f32 accumulation.
    o_ref[...] = jnp.dot(
        x_ref[...], w_ref[...], preferred_element_type=jnp.float32
    ).astype(o_ref.dtype)


def _lanedense_matmul_kernel(wt_ref, xt_ref, ot_ref):
    # out^T[:, col_tile] = W^T @ x^T[:, col_tile] ; lane-dense [10, TN] output
    # block -> unmasked vst stores and dense HBM DMAs.
    ot_ref[...] = jnp.dot(
        wt_ref[...], xt_ref[...], preferred_element_type=jnp.float32
    ).astype(ot_ref.dtype)


# ---------------------------------------------------------------------------
# Tile-size selection
# ---------------------------------------------------------------------------
_FAST_PATH_MAX_ROWS = 4096   # below this, a plain XLA dot beats any pallas_call
_MAX_TM = 4096               # (tm,10) f32 pads to (tm,128): 512*tm B per buffer
_MAX_TN = 8192               # (10,tn) f32 pads to (16,tn): 64*tn B per buffer


def _pick_tm(n):
    """Row tile for the [N,10] path: big tiles, >=2 grid steps when possible."""
    if n <= 512:
        return n                                   # full-extent block
    half = (((n + 1) // 2) + 7) // 8 * 8           # ~n/2, multiple of 8
    return min(_MAX_TM, half)                      # >= 2 parallel steps (v7x)


def _pick_tn(n):
    """Column tile for the transposed lane-dense path (multiple of 128)."""
    if n <= 1024:
        return n                                   # full-extent block
    half = (((n + 1) // 2) + 127) // 128 * 128     # ~n/2, multiple of 128
    return min(_MAX_TN, half)


# ---------------------------------------------------------------------------
# Wrappers
# ---------------------------------------------------------------------------
def _fold_weights(params):
    """W = w0 @ w1, folded once outside the kernel, kept in f32."""
    w0 = params["pl0"]       # param_list[0]
    w1 = params["weight1"]   # param_dict['weight1']
    assert w0.dtype == jnp.float32 and w1.dtype == jnp.float32
    return jnp.dot(w0, w1, preferred_element_type=jnp.float32)


def my_model_forward(x, params, *, force_pallas=False):
    """x: [N, 10] float32 -> [N, 10] float32.

    Only 'pl0' (param_list[0]) and 'weight1' participate in the forward pass,
    exactly as in the PyTorch module ('pl1' / 'weight2' are unused).
    """
    assert x.dtype == jnp.float32, "kernel validated for f32 inputs only"
    n, k = x.shape
    w = _fold_weights(params)
    assert k == w.shape[0]
    n_out = w.shape[1]

    # Fast path: this op is launch-overhead bound at small/moderate N; a plain
    # (fusible) XLA dot is strictly faster than any standalone Pallas call.
    if not force_pallas and n <= _FAST_PATH_MAX_ROWS:
        return jnp.dot(x, w, preferred_element_type=jnp.float32)

    tm = _pick_tm(n)
    grid = (pl.cdiv(n, tm),)
    itemsize = jnp.dtype(x.dtype).itemsize
    cost = pl.CostEstimate(
        flops=2 * n * k * n_out,
        transcendentals=0,
        bytes_accessed=(n * k + k * n_out + n * n_out) * itemsize,
    )

    return pl.pallas_call(
        _rowtile_matmul_kernel,
        out_shape=jax.ShapeDtypeStruct((n, n_out), x.dtype),
        grid=grid,
        in_specs=[
            pl.BlockSpec((tm, k), lambda i: (i, 0)),      # x: row tiles
            pl.BlockSpec((k, n_out), lambda i: (0, 0)),   # folded W: resident
        ],
        out_specs=pl.BlockSpec((tm, n_out), lambda i: (i, 0)),
        compiler_params=pltpu.CompilerParams(
            dimension_semantics=("parallel",),            # v7x: shard both TCs
            vmem_limit_bytes=32 << 20,                    # safe on v5e/v6e/v7x
        ),
        cost_estimate=cost,
    )(x, w)


def my_model_forward_transposed(x_t, params):
    """Lane-dense path for fused producers/consumers.

    x_t: x^T with shape [10, N] float32; returns out^T with shape [10, N].
    Output blocks are [10, TN] with TN a large multiple of 128, so stores are
    unmasked and HBM DMAs are dense.
    """
    assert x_t.dtype == jnp.float32, "kernel validated for f32 inputs only"
    k, n = x_t.shape
    w = _fold_weights(params)
    assert k == w.shape[0]
    n_out = w.shape[1]
    w_t = w.T                                             # (n_out, k), tiny

    tn = _pick_tn(n)
    grid = (pl.cdiv(n, tn),)
    cost = pl.CostEstimate(
        flops=2 * n * k * n_out,
        transcendentals=0,
        bytes_accessed=(n * k + k * n_out + n * n_out) * 4,
    )

    return pl.pallas_call(
        _lanedense_matmul_kernel,
        out_shape=jax.ShapeDtypeStruct((n_out, n), jnp.float32),
        grid=grid,
        in_specs=[
            pl.BlockSpec((n_out, k), lambda i: (0, 0)),   # W^T: resident
            pl.BlockSpec((k, tn), lambda i: (0, i)),      # x^T: lane tiles
        ],
        out_specs=pl.BlockSpec((n_out, tn), lambda i: (0, i)),
        compiler_params=pltpu.CompilerParams(
            dimension_semantics=("parallel",),
            vmem_limit_bytes=32 << 20,
        ),
        cost_estimate=cost,
    )(w_t, x_t)


def init_params(key):
    # Deterministic synthetic init mirroring the module's __init__ shapes
    # (torch.randn ~ standard normal).
    k0, k1, k2, k3 = jax.random.split(key, 4)
    return {
        "pl0": jax.random.normal(k0, (10, 10), jnp.float32),      # param_list[0]
        "pl1": jax.random.normal(k1, (10, 10), jnp.float32),      # param_list[1] (unused)
        "weight1": jax.random.normal(k2, (10, 10), jnp.float32),  # param_dict['weight1']
        "weight2": jax.random.normal(k3, (20, 20), jnp.float32),  # param_dict['weight2'] (unused)
    }


if __name__ == "__main__":
    key = jax.random.PRNGKey(0)
    kp, k1, k2, k3 = jax.random.split(key, 4)
    params = init_params(kp)

    def ref_fn(x):
        return (x @ params["pl0"]) @ params["weight1"]

    # 1) Small batch: default fast path (fused XLA dot) + forced Pallas path.
    x_small = jax.random.normal(k1, (8, 10), jnp.float32)
    out_fast = jax.block_until_ready(my_model_forward(x_small, params))
    out_pallas = jax.block_until_ready(
        my_model_forward(x_small, params, force_pallas=True))
    ref_small = ref_fn(x_small)
    assert out_pallas.shape == (8, 10)
    assert jnp.allclose(out_fast, ref_small, atol=1e-3, rtol=1e-4)
    assert jnp.allclose(out_pallas, ref_small, atol=1e-3, rtol=1e-4)

    # 2) Ragged row count: 2 parallel row tiles, last block partially masked.
    x_ragged = jax.random.normal(k2, (1000, 10), jnp.float32)
    out_ragged = jax.block_until_ready(
        my_model_forward(x_ragged, params, force_pallas=True))
    assert out_ragged.shape == (1000, 10)
    assert jnp.allclose(out_ragged, ref_fn(x_ragged), atol=1e-3, rtol=1e-4)

    # 3) Lane-dense transposed layout (input already supplied as x^T).
    x_t = jax.random.normal(k3, (10, 2048), jnp.float32)
    out_t = jax.block_until_ready(my_model_forward_transposed(x_t, params))
    assert out_t.shape == (10, 2048)
    assert jnp.allclose(out_t.T, ref_fn(x_t.T), atol=1e-3, rtol=1e-4)

    print("KERNEL_OK")
</pallas_src>

<mosaic_0001>
module attributes {stable_mosaic.version = 11 : i64} {
  func.func @_rowtile_matmul_kernel(%arg0: i32, %arg1: memref<8x10xf32, #tpu.memory_space<vmem>>, %arg2: memref<10x10xf32, #tpu.memory_space<vmem>>, %arg3: memref<8x10xf32, #tpu.memory_space<vmem>>) attributes {dimension_semantics = [#tpu.dimension_semantics<parallel>], iteration_bounds = array<i64: 1>, scalar_prefetch = 0 : i64, scratch_operands = 0 : i64, tpu.core_type = #tpu.core_type<tc>, window_params = [{transform_indices = @transform_0, window_bounds = array<i64: 8, 10>}, {pipeline_mode = #tpu.pipeline_mode<synchronous>, transform_indices = @transform_1, window_bounds = array<i64: 10, 10>}, {transform_indices = @transform_2, window_bounds = array<i64: 8, 10>}]} {
    %c0 = arith.constant 0 : index
    %c0_0 = arith.constant 0 : index
    %0 = vector.load %arg1[%c0, %c0_0] : memref<8x10xf32, #tpu.memory_space<vmem>>, vector<8x10xf32>
    %c0_1 = arith.constant 0 : index
    %c0_2 = arith.constant 0 : index
    %1 = vector.load %arg2[%c0_1, %c0_2] : memref<10x10xf32, #tpu.memory_space<vmem>>, vector<10x10xf32>
    %cst = arith.constant dense<0.000000e+00> : vector<8x10xf32>
    %2 = tpu.matmul %0, %1, %cst {dimension_numbers = #tpu.dot_dimension_numbers<[1], [0], [0], [1], [0, 0, 1, 1], [], []>} : vector<8x10xf32>, vector<10x10xf32>, vector<8x10xf32> -> vector<8x10xf32>
    %c0_3 = arith.constant 0 : index
    %c0_4 = arith.constant 0 : index
    %3 = vector.load %arg3[%c0_3, %c0_4] : memref<8x10xf32, #tpu.memory_space<vmem>>, vector<8x10xf32>
    tpu.vector_store %arg3[%c0_3, %c0_4], %2 {strides = array<i32>} : memref<8x10xf32, #tpu.memory_space<vmem>>, vector<8x10xf32>,
    return
  }
  func.func @transform_0(%arg0: i32) -> (i32, i32) {
    %c0_i32 = arith.constant 0 : i32
    %c0_i32_0 = arith.constant 0 : i32
    return %arg0, %c0_i32 : i32, i32
  }
  func.func @transform_1(%arg0: i32) -> (i32, i32) {
    %c0_i32 = arith.constant 0 : i32
    %c0_i32_0 = arith.constant 0 : i32
    %c0_i32_1 = arith.constant 0 : i32
    return %c0_i32, %c0_i32_0 : i32, i32
  }
  func.func @transform_2(%arg0: i32) -> (i32, i32) {
    %c0_i32 = arith.constant 0 : i32
    %c0_i32_0 = arith.constant 0 : i32
    return %arg0, %c0_i32 : i32, i32
  }
}

</mosaic_0001>

<llo_original>
// kernel: tpu_custom_call.1
$region0: #{tpu_custom_call.1}
  #allocation0 [shape = 'u32[]', space=smem, size = 0x4, offset = 0x4, fixed_abs, tag = 'smem constant byte address 0x4 - core index']
  #allocation1 [shape = 'u32[72,128]{1,0:T(1,128)}', space=vmem, size = 0x9000, scoped, tag = 'internal scratch']
  %s0 = inlined_call_operand.hbm [shape: f32[8,10], index: 0, kind: input, shape index: {}]
  %s1 = inlined_call_operand.hbm [shape: f32[10,10], index: 1, kind: input, shape index: {}]
  %s2 = inlined_call_operand.hbm [shape: f32[8,10], index: 2, kind: output, shape index: {}]
  %s3 = sld [smem:[#allocation0]]
  $region26: #{tpu_custom_call.1} parent=0
    _
  %s5 = ssub.s32 1, %s3
  %s6 = scalar_select 0, %s5, %s3
  $region1: #{tpu_custom_call.1} parent=0
    #allocation2 [shape = 'u8[4096]{0}', space=vmem, size = 0x1000, scoped, tag = 'input window, operand 0, single buffered']
    #allocation3 [shape = 's32[1]{0}', space=sflag, size = 0x4, scoped, tag = 'scoped memory for tpu_custom_call.1']
    #allocation4 [shape = 's32[1]{0}', space=sflag, size = 0x4, scoped, tag = 'scoped memory for tpu_custom_call.1']
    #allocation5 [shape = 'u8[8192]{0}', space=vmem, size = 0x2000, scoped, tag = 'input window, operand 1, single buffered']
    #allocation6 [shape = 's32[1]{0}', space=sflag, size = 0x4, scoped, tag = 'scoped memory for tpu_custom_call.1']
    #allocation7 [shape = 'u8[4096]{0}', space=vmem, size = 0x1000, scoped, tag = 'output window, operand 0, single buffered']
    %7 = vsyncpa [#allocation3], 0
    %8 = vsyncpa [#allocation6], 0
    %9 = vsyncpa [#allocation4], 0
    // Predicated region
    $region2: #{tpu_custom_call.1} parent=1 // pred_check
      _
    $region3: #{tpu_custom_call.1} parent=1 // pred_check_branch
      %11 = sbr.rel (0) target = $region5
    $region4: #{tpu_custom_call.1} parent=1 // pred_region
      %13 = vsyncadd [#allocation3], 0
      %s15 = sshll.u32 %s0, 4
      %s16 = int_to_ptr.hbm [resolvable:$true] %s15
      %s17 = sshll.u32 [#allocation2], 4
      %s18 = int_to_ptr.vmem [resolvable:$true] %s17
      %20 = dma.hbm_to_vmem [thread:$0]  %s16, 128, %s18, [#allocation3]
    $region5: #{tpu_custom_call.1} parent=1 // pred_fallthru
      _
    // Predicated region
    $region6: #{tpu_custom_call.1} parent=1 // pred_check
      _
    $region7: #{tpu_custom_call.1} parent=1 // pred_check_branch
      %22 = sbr.rel (0) target = $region9
    $region8: #{tpu_custom_call.1} parent=1 // pred_region
      %24 = vsyncadd [#allocation6], 0
      %s25 = sshll.u32 %s1, 4
      %s26 = int_to_ptr.hbm [resolvable:$true] %s25
      %s27 = sshll.u32 [#allocation5], 4
      %s28 = int_to_ptr.vmem [resolvable:$true] %s27
      %33 = dma.hbm_to_vmem [thread:$0]  %s26, 256, %s28, [#allocation6], 128, 128, 8
    $region9: #{tpu_custom_call.1} parent=1 // pred_fallthru
      _
    // Predicated region
    $region10: #{tpu_custom_call.1} parent=1 // pred_check
      _
    $region11: #{tpu_custom_call.1} parent=1 // pred_check_branch
      %35 = sbr.rel (0) target = $region13
    $region12: #{tpu_custom_call.1} parent=1 // pred_region
      %37 = dma.done [#allocation3], 128
    $region13: #{tpu_custom_call.1} parent=1 // pred_fallthru
      _
    // Predicated region
    $region14: #{tpu_custom_call.1} parent=1 // pred_check
      _
    $region15: #{tpu_custom_call.1} parent=1 // pred_check_branch
      %39 = sbr.rel (0) target = $region17
    $region16: #{tpu_custom_call.1} parent=1 // pred_region
      %41 = dma.done [#allocation6], 256
    $region17: #{tpu_custom_call.1} parent=1 // pred_fallthru
      _
    %v42 = vld [vmem:[#allocation2] sm:$0xff]
    %v43 = vld [vmem:[#allocation5] sm:$0xff]
    %v44 = vld [vmem:[#allocation5 + $0x8] sm:$0x3]
    %vm45 = vcmask 80896
    %v47 = vsel %vm45, %v42, 0
    %vm49 = vcmask 1041408
    %v51 = vsel %vm49, %v44, 0
    %53 = vmatpush.msra.mxu0 0.0
    %54 = vmatpush.msra.mxu0 0.0
    %55 = vmatpush.msra.mxu0 0.0
    %56 = vmatpush.msra.mxu0 0.0
    %57 = vmatpush.msra.mxu0 0.0
    %58 = vmatpush.msra.mxu0 0.0
    %59 = vmatpush.msra.mxu0 0.0
    %60 = vmatpush.msra.mxu0 0.0
    %61 = vmatpush.msra.mxu0 0.0
    %62 = vmatpush.msra.mxu0 0.0
    %63 = vmatpush.msra.mxu0 0.0
    %64 = vmatpush.msra.mxu0 0.0
    %65 = vmatpush.msra.mxu0 0.0
    %66 = vmatpush.msra.mxu0 0.0
    %67 = vmatpush.msra.mxu0 %v51
    %68 = vmatpush.msra.mxu0 %v43
    %69 = vmatmul.f32.gmra.mxu0 %v47
    %v70 = vpop.f32.mrf.mxu0
    %v71 = vadd.f32 0.0, %v70
    %72 = vdwg.mxu0
    %73 = vst.msk [vmem:[#allocation7] sm:$0xff] %vm45, %v71
    // Predicated region
    $region18: #{tpu_custom_call.1} parent=1 // pred_check
      _
    $region19: #{tpu_custom_call.1} parent=1 // pred_check_branch
      %75 = sbr.rel (0) target = $region21
    $region20: #{tpu_custom_call.1} parent=1 // pred_region
      %77 = vsyncadd [#allocation4], 0
      %s79 = sshll.u32 [#allocation7], 4
      %s80 = int_to_ptr.vmem [resolvable:$true] %s79
      %s81 = sshll.u32 %s2, 4
      %s82 = int_to_ptr.hbm [resolvable:$true] %s81
      %84 = dma.vmem_to_hbm [thread:$0]  %s80, 128, %s82, [#allocation4]
    $region21: #{tpu_custom_call.1} parent=1 // pred_fallthru
      _
    // Predicated region
    $region22: #{tpu_custom_call.1} parent=1 // pred_check
      _
    $region23: #{tpu_custom_call.1} parent=1 // pred_check_branch
      %86 = sbr.rel (0) target = $region25
    $region24: #{tpu_custom_call.1} parent=1 // pred_region
      %88 = dma.done [#allocation4], 128
    $region25: #{tpu_custom_call.1} parent=1 // pred_fallthru
      _
    %89 = vsyncpa [#allocation3], 1
    %90 = vsyncpa [#allocation6], 1
    %91 = vsyncpa [#allocation4], 1

</llo_original>
